<compile_context>
chip_gen: v5e
topology: v5e:2x2
jax: 0.10.0
libtpu: 0.0.40
codegen_flags: <defaults>
</compile_context>

<pallas_src>
import jax
import jax.numpy as jnp
from jax.experimental import pallas as pl
from jax.experimental.pallas import tpu as pltpu

NORM = 1000.0


def _gp_partial_kernel_ent(emb_ref, gram_ref, ent_ref, out_ref):
    # emb_ref : (1, TN, D)     row tile of embedding e = program_id(1)
    # gram_ref: (D, D)         G = W @ W^T, resident every step (symmetric)
    # ent_ref : (TN, D)        entropy_qz row tile (index independent of e)
    # out_ref : (1, 1, 8, 128) partial-sum block for this (e, n) grid point
    x = emb_ref[0]                                                  # (TN, D)
    d = jnp.dot(x, gram_ref[...], preferred_element_type=jnp.float32)
    partial = jnp.sum(ent_ref[...] * (d * d))
    out_ref[...] = jnp.full(out_ref.shape, partial, dtype=jnp.float32)


def _gp_partial_kernel_noent(emb_ref, gram_ref, out_ref):
    x = emb_ref[0]                                                  # (TN, D)
    d = jnp.dot(x, gram_ref[...], preferred_element_type=jnp.float32)
    partial = jnp.sum(d * d)
    out_ref[...] = jnp.full(out_ref.shape, partial, dtype=jnp.float32)


def _choose_row_tile(n, d, tile_budget_bytes=4 << 20):
    """Largest row tile TN dividing N that is (8,128)-legal and fits the budget."""
    cap_rows = max(1, tile_budget_bytes // (d * 4))
    if n <= cap_rows:
        return n                      # full N -> block equals full array dim
    for tn in range(min(n, cap_rows), 0, -1):
        if n % tn == 0 and (tn % 8 == 0 or tn == n):
            return tn
    return n


def gradient_penalty_loss(embeddings, w, entropy_qz=None):
    """embeddings: (E, N, D) f32, w: (D, K) f32, entropy_qz: (N, D) f32 or None."""
    embeddings = embeddings.astype(jnp.float32)
    E, N, D = embeddings.shape

    # Analytic VJP of the linear head: grad_e = 2 * emb_e @ (W @ W^T).
    w32 = w.astype(jnp.float32)
    gram = jnp.dot(w32, w32.T)                                      # (D, D)

    TN = _choose_row_tile(N, D)
    n_tiles = N // TN

    emb_spec = pl.BlockSpec((1, TN, D), lambda n, e: (e, n, 0))
    gram_spec = pl.BlockSpec((D, D), lambda n, e: (0, 0))
    out_spec = pl.BlockSpec((1, 1, 8, 128), lambda n, e: (e, n, 0, 0))
    out_shape = jax.ShapeDtypeStruct((E, n_tiles, 8, 128), jnp.float32)

    matmul_flops = 2 * E * N * D * D
    if entropy_qz is not None:
        kernel = _gp_partial_kernel_ent
        in_specs = [emb_spec, gram_spec,
                    pl.BlockSpec((TN, D), lambda n, e: (n, 0))]
        args = (embeddings, gram, entropy_qz.astype(jnp.float32))
        bytes_accessed = 4 * (E * N * D + D * D + N * D + E * n_tiles * 8 * 128)
        flops = matmul_flops + 3 * E * N * D
    else:
        kernel = _gp_partial_kernel_noent
        in_specs = [emb_spec, gram_spec]
        args = (embeddings, gram)
        bytes_accessed = 4 * (E * N * D + D * D + E * n_tiles * 8 * 128)
        flops = matmul_flops + 2 * E * N * D

    partials = pl.pallas_call(
        kernel,
        out_shape=out_shape,
        grid_spec=pltpu.PrefetchScalarGridSpec(
            num_scalar_prefetch=0,
            grid=(n_tiles, E),              # ent tile stays resident across E
            in_specs=in_specs,
            out_specs=out_spec,
        ),
        compiler_params=pltpu.CompilerParams(
            dimension_semantics=("parallel", "parallel"),
            vmem_limit_bytes=48 * 1024 * 1024,
        ),
        cost_estimate=pl.CostEstimate(
            flops=flops, transcendentals=0, bytes_accessed=bytes_accessed),
    )(*args)

    # All scalar constants folded into a single final multiply (exact N*D count,
    # no padded lanes since the D / row-tile blocks cover the full array dims).
    scale = (2.0 / NORM) ** 2 / float(E * N * D)
    return jnp.sum(partials[:, :, 0, 0]) * scale


def _reference_loss(embeddings, w, entropy_qz):
    """Pure-JAX reference using real autodiff (mirrors torch.autograd.grad)."""
    def pred_loss_sum(embs):
        y = jnp.einsum("end,dk->enk", embs, w)
        return jnp.sum(jnp.square(y))

    grads = jax.grad(pred_loss_sum)(embeddings)            # (E, N, D)
    g = grads / NORM
    gs = jnp.square(g)
    ent = jnp.ones_like(embeddings[0]) if entropy_qz is None else entropy_qz
    per_emb = jnp.mean(ent[None, :, :] * gs, axis=(1, 2))  # (E,)
    return jnp.mean(per_emb)


if __name__ == "__main__":
    key = jax.random.PRNGKey(0)
    k1, k2, k3 = jax.random.split(key, 3)

    E, N, D, K = 2, 8, 32, 16   # 2 embeddings, batch 8, hidden 32, pred dim 16

    embeddings = jax.random.normal(k1, (E, N, D), dtype=jnp.float32)
    w = jax.random.normal(k2, (D, K), dtype=jnp.float32) * 0.1
    entropy_qz = jax.nn.softplus(jax.random.normal(k3, (N, D), dtype=jnp.float32))

    loss = jax.block_until_ready(gradient_penalty_loss(embeddings, w, entropy_qz))
    ref = _reference_loss(embeddings, w, entropy_qz)
    assert jnp.allclose(loss, ref, rtol=1e-5, atol=1e-8), (loss, ref)

    # Also exercise the entropy_qz=None path (module default).
    loss_none = jax.block_until_ready(gradient_penalty_loss(embeddings, w, None))
    ref_none = _reference_loss(embeddings, w, None)
    assert jnp.allclose(loss_none, ref_none, rtol=1e-5, atol=1e-8), (loss_none, ref_none)

    print("KERNEL_OK")
</pallas_src>

<mosaic_0001>
module attributes {stable_mosaic.version = 11 : i64} {
  func.func @_gp_partial_kernel_ent(%arg0: i32, %arg1: i32, %arg2: memref<1x8x32xf32, #tpu.memory_space<vmem>>, %arg3: memref<32x32xf32, #tpu.memory_space<vmem>>, %arg4: memref<8x32xf32, #tpu.memory_space<vmem>>, %arg5: memref<1x1x8x128xf32, #tpu.memory_space<vmem>>) attributes {dimension_semantics = [#tpu.dimension_semantics<parallel>, #tpu.dimension_semantics<parallel>], iteration_bounds = array<i64: 1, 2>, scalar_prefetch = 0 : i64, scratch_operands = 0 : i64, tpu.core_type = #tpu.core_type<tc>, window_params = [{transform_indices = @transform_0, window_bounds = array<i64: 1, 8, 32>}, {pipeline_mode = #tpu.pipeline_mode<synchronous>, transform_indices = @transform_1, window_bounds = array<i64: 32, 32>}, {transform_indices = @transform_2, window_bounds = array<i64: 8, 32>}, {transform_indices = @transform_3, window_bounds = array<i64: 1, 1, 8, 128>}]} {
    %c0 = arith.constant 0 : index
    %c0_0 = arith.constant 0 : index
    %c0_1 = arith.constant 0 : index
    %0 = vector.load %arg2[%c0, %c0_0, %c0_1] : memref<1x8x32xf32, #tpu.memory_space<vmem>>, vector<1x8x32xf32>
    %1 = vector.shape_cast %0 : vector<1x8x32xf32> to vector<8x32xf32>
    %c0_2 = arith.constant 0 : index
    %c0_3 = arith.constant 0 : index
    %2 = vector.load %arg3[%c0_2, %c0_3] : memref<32x32xf32, #tpu.memory_space<vmem>>, vector<32x32xf32>
    %cst = arith.constant dense<0.000000e+00> : vector<8x32xf32>
    %3 = tpu.matmul %1, %2, %cst {dimension_numbers = #tpu.dot_dimension_numbers<[1], [0], [0], [1], [0, 0, 1, 1], [], []>} : vector<8x32xf32>, vector<32x32xf32>, vector<8x32xf32> -> vector<8x32xf32>
    %c0_4 = arith.constant 0 : index
    %c0_5 = arith.constant 0 : index
    %4 = vector.load %arg4[%c0_4, %c0_5] : memref<8x32xf32, #tpu.memory_space<vmem>>, vector<8x32xf32>
    %5 = arith.mulf %3, %3 : vector<8x32xf32>
    %6 = arith.mulf %4, %5 : vector<8x32xf32>
    %7 = vector.shape_cast %6 : vector<8x32xf32> to vector<1x8x32xf32>
    %cst_6 = arith.constant dense<0.000000e+00> : vector<1xf32>
    %8 = vector.multi_reduction <add>, %7, %cst_6 [1, 2] : vector<1x8x32xf32> to vector<1xf32>
    %9 = vector.shape_cast %8 : vector<1xf32> to vector<1x1x1xf32>
    %10 = vector.extract %9[0, 0, 0] : f32 from vector<1x1x1xf32>
    %11 = vector.broadcast %10 : f32 to vector<1x1x8x128xf32>
    %c0_7 = arith.constant 0 : index
    %c0_8 = arith.constant 0 : index
    %c0_9 = arith.constant 0 : index
    %c0_10 = arith.constant 0 : index
    %12 = vector.load %arg5[%c0_7, %c0_8, %c0_9, %c0_10] : memref<1x1x8x128xf32, #tpu.memory_space<vmem>>, vector<1x1x8x128xf32>
    tpu.vector_store %arg5[%c0_7, %c0_8, %c0_9, %c0_10], %11 {strides = array<i32>} : memref<1x1x8x128xf32, #tpu.memory_space<vmem>>, vector<1x1x8x128xf32>,
    return
  }
  func.func @transform_0(%arg0: i32, %arg1: i32) -> (i32, i32, i32) {
    %c0_i32 = arith.constant 0 : i32
    %c0_i32_0 = arith.constant 0 : i32
    return %arg1, %arg0, %c0_i32 : i32, i32, i32
  }
  func.func @transform_1(%arg0: i32, %arg1: i32) -> (i32, i32) {
    %c0_i32 = arith.constant 0 : i32
    %c0_i32_0 = arith.constant 0 : i32
    %c0_i32_1 = arith.constant 0 : i32
    return %c0_i32, %c0_i32_0 : i32, i32
  }
  func.func @transform_2(%arg0: i32, %arg1: i32) -> (i32, i32) {
    %c0_i32 = arith.constant 0 : i32
    %c0_i32_0 = arith.constant 0 : i32
    return %arg0, %c0_i32 : i32, i32
  }
  func.func @transform_3(%arg0: i32, %arg1: i32) -> (i32, i32, i32, i32) {
    %c0_i32 = arith.constant 0 : i32
    %c0_i32_0 = arith.constant 0 : i32
    %c0_i32_1 = arith.constant 0 : i32
    return %arg1, %arg0, %c0_i32, %c0_i32_0 : i32, i32, i32, i32
  }
}

</mosaic_0001>

<llo_original>
// kernel: tpu_custom_call.1
$region0: #{tpu_custom_call.1}
  #allocation0 [shape = 'u32[]', space=smem, size = 0x4, offset = 0x4, fixed_abs, tag = 'smem constant byte address 0x4 - core index']
  #allocation1 [shape = 'u32[72,128]{1,0:T(1,128)}', space=vmem, size = 0x9000, scoped, tag = 'internal scratch']
  %s0 = inlined_call_operand.hbm [shape: f32[2,8,32], index: 0, kind: input, shape index: {}]
  %s1 = inlined_call_operand.hbm [shape: f32[32,32], index: 1, kind: input, shape index: {}]
  %s2 = inlined_call_operand.hbm [shape: f32[8,32], index: 2, kind: input, shape index: {}]
  %s3 = inlined_call_operand.hbm [shape: f32[2,1,8,128], index: 3, kind: output, shape index: {}]
  %s4 = sld [smem:[#allocation0]]
  $region57: #{tpu_custom_call.1} parent=0
    _
  %s6 = ssub.s32 1, %s4
  %s7 = scalar_select 0, %s6, %s4
  $region1: #{tpu_custom_call.1} parent=0
    #allocation2 [shape = 'u8[8192]{0}', space=vmem, size = 0x2000, scoped, tag = 'input window, operand 0']
    #allocation3 [shape = 's32[2]{0}', space=sflag, size = 0x8, scoped, tag = 'scoped memory for tpu_custom_call.1']
    #allocation4 [shape = 's32[2]{0}', space=sflag, size = 0x8, scoped, tag = 'scoped memory for tpu_custom_call.1']
    #allocation5 [shape = 'u8[16384]{0}', space=vmem, size = 0x4000, scoped, tag = 'input window, operand 1, single buffered']
    #allocation6 [shape = 's32[1]{0}', space=sflag, size = 0x4, scoped, tag = 'scoped memory for tpu_custom_call.1']
    #allocation7 [shape = 'u8[4096]{0}', space=vmem, size = 0x1000, scoped, tag = 'input window, operand 2, single buffered']
    #allocation8 [shape = 'u8[8192]{0}', space=vmem, size = 0x2000, scoped, tag = 'output window, operand 0']
    %8 = vsyncpa [#allocation3], 0
    %s9 = scalar_lea.sflag [#allocation3], 1
    %10 = vsyncpa %s9, 0
    %11 = vsyncpa [#allocation6], 0
    %12 = vsyncpa [#allocation4], 0
    %s13 = scalar_lea.sflag [#allocation4], 1
    %14 = vsyncpa %s13, 0
    loop: start=0, step=1, limit=4
    $region2: #{tpu_custom_call.1} parent=1 // loop_pre_header
      _
    $region3: #{tpu_custom_call.1} parent=1 // loop_header
      %s16 = sphi 0, %s20
      %p17 = scmp.ge.s32.totalorder %s16, 4
      %s23 = sphi 0, %s35
      %s24 = sphi 0, %s31
      %s25 = sphi 0, %s23
      %s26 = sphi 0, %s24
      %s27 = sphi 0, %s25
      %s28 = sphi 0, %s26
      %s40 = sphi 0, %s42
      %s43 = sphi 0, %s40
      %s44 = sphi 0, %s43
      %s60 = sphi 0, %s44
      %s64 = sphi 0, %s64
      %s66 = sphi 0, %s64
      %s67 = sphi 0, %s66
      %s81 = sphi 0, %s67
      %s87 = sphi 0, %s89
      %s90 = sphi 0, %s87
      %s91 = sphi 0, %s90
      %s107 = sphi 0, %s91
      %s115 = sphi 0, %s117
      %s118 = sphi 0, %s115
      %s119 = sphi 0, %s118
      %s135 = sphi 0, %s119
    $region4: #{tpu_custom_call.1} parent=1 // loop_header_branch
      %19 = sbr.rel (%p17) target = $region8
    $region5: #{tpu_custom_call.1} parent=1 // loop_body
      %s21 = ssub.s32 %s16, 1
      %s22 = ssub.s32 %s16, 2
      %s29 = sadd.s32 1, %s24
      %p30 = scmp.ge.s32.totalorder %s29, 2
      %s31 = scalar_select %p30, 0, %s29
      %s32 = sadd.s32 1, %s23
      %s33 = scalar_select %p30, %s32, %s23
      %p34 = scmp.ge.s32.totalorder %s33, 1
      %s35 = scalar_select %p34, 0, %s33
      %s36 = ssub.s32 %s24, %s31
      %s37 = ssub.s32 %s23, %s35
      %s38 = sor.u32 %s36, %s37
      %p39 = scmp.eq.s32.totalorder %s38, 0
      %s41 = sadd.s32 %s40, 1
      %s42 = scalar_select %p39, %s40, %s41
      %p45 = pneg %p39
      %p46 = scmp.eq.s32.totalorder %s16, 1
      %p47 = por %p45, %p46
      %p48 = scmp.ne.s32.totalorder %s40, %s43
      %p49 = scmp.eq.s32.totalorder %s16, 0
      %p50 = por %p48, %p49
      %p51 = scmp.ne.s32.totalorder %s40, %s43
      %p52 = scmp.eq.s32.totalorder %s21, 1
      %p53 = por %p51, %p52
      %p54 = scmp.ne.s32.totalorder %s43, %s44
      %p55 = scmp.eq.s32.totalorder %s21, 0
      %p56 = por %p54, %p55
      %p57 = scmp.ne.s32.totalorder %s43, %s44
      %p58 = scmp.eq.s32.totalorder %s22, 1
      %p59 = por %p57, %p58
      %p61 = scmp.ne.s32.totalorder %s44, %s60
      %p62 = scmp.eq.s32.totalorder %s22, 0
      %p63 = por %p61, %p62
      %s65 = sadd.s32 %s64, 1
      %p68 = scmp.eq.s32.totalorder %s16, 1
      %p69 = scmp.ne.s32.totalorder %s64, %s66
      %p70 = scmp.eq.s32.totalorder %s16, 0
      %p71 = por %p69, %p70
      %p72 = scmp.ne.s32.totalorder %s64, %s66
      %p73 = scmp.eq.s32.totalorder %s21, 1
      %p74 = por %p72, %p73
      %p75 = scmp.ne.s32.totalorder %s66, %s67
      %p76 = scmp.eq.s32.totalorder %s21, 0
      %p77 = por %p75, %p76
      %p78 = scmp.ne.s32.totalorder %s66, %s67
      %p79 = scmp.eq.s32.totalorder %s22, 1
      %p80 = por %p78, %p79
      %p82 = scmp.ne.s32.totalorder %s67, %s81
      %p83 = scmp.eq.s32.totalorder %s22, 0
      %p84 = por %p82, %p83
      %s85 = ssub.s32 %s23, %s35
      %p86 = scmp.eq.s32.totalorder %s85, 0
      %s88 = sadd.s32 %s87, 1
      %s89 = scalar_select %p86, %s87, %s88
      %p92 = pneg %p86
      %p93 = scmp.eq.s32.totalorder %s16, 1
      %p94 = por %p92, %p93
      %p95 = scmp.ne.s32.totalorder %s87, %s90
      %p96 = scmp.eq.s32.totalorder %s16, 0
      %p97 = por %p95, %p96
      %p98 = scmp.ne.s32.totalorder %s87, %s90
      %p99 = scmp.eq.s32.totalorder %s21, 1
      %p100 = por %p98, %p99
      %p101 = scmp.ne.s32.totalorder %s90, %s91
      %p102 = scmp.eq.s32.totalorder %s21, 0
      %p103 = por %p101, %p102
      %p104 = scmp.ne.s32.totalorder %s90, %s91
      %p105 = scmp.eq.s32.totalorder %s22, 1
      %p106 = por %p104, %p105
      %p108 = scmp.ne.s32.totalorder %s91, %s107
      %p109 = scmp.eq.s32.totalorder %s22, 0
      %p110 = por %p108, %p109
      %s111 = ssub.s32 %s24, %s31
      %s112 = ssub.s32 %s23, %s35
      %s113 = sor.u32 %s111, %s112
      %p114 = scmp.eq.s32.totalorder %s113, 0
      %s116 = sadd.s32 %s115, 1
      %s117 = scalar_select %p114, %s115, %s116
      %p120 = pneg %p114
      %p121 = scmp.eq.s32.totalorder %s16, 1
      %p122 = por %p120, %p121
      %p123 = scmp.ne.s32.totalorder %s115, %s118
      %p124 = scmp.eq.s32.totalorder %s16, 0
      %p125 = por %p123, %p124
      %p126 = scmp.ne.s32.totalorder %s115, %s118
      %p127 = scmp.eq.s32.totalorder %s21, 1
      %p128 = por %p126, %p127
      %p129 = scmp.ne.s32.totalorder %s118, %s119
      %p130 = scmp.eq.s32.totalorder %s21, 0
      %p131 = por %p129, %p130
      %p132 = scmp.ne.s32.totalorder %s118, %s119
      %p133 = scmp.eq.s32.totalorder %s22, 1
      %p134 = por %p132, %p133
      %p136 = scmp.ne.s32.totalorder %s119, %s135
      %p137 = scmp.eq.s32.totalorder %s22, 0
      %p138 = por %p136, %p137
      %p139 = scmp.le.s32.totalorder 1, %s16
      %p140 = scmp.lt.s32.totalorder %s16, 3
      %p141 = pnand %p139, %p140
      %p142 = pneg %p141
      // Predicated region
      $region9: #{tpu_custom_call.1} parent=5 // pred_check
        _
      $region10: #{tpu_custom_call.1} parent=5 // pred_check_branch
        %144 = sbr.rel (%p141) target = $region12
      $region11: #{tpu_custom_call.1} parent=5 // pred_region
        %s145 = ssub.s32 %s16, 1
        // Predicated region
        $region13: #{tpu_custom_call.1} parent=11 // pred_check
          %p146 = pneg %p77
        $region14: #{tpu_custom_call.1} parent=11 // pred_check_branch
          %148 = sbr.rel (%p146) target = $region16
        $region15: #{tpu_custom_call.1} parent=11 // pred_region
          %150 = vsyncadd [#allocation6], 0
          %s151 = sshll.u32 %s1, 4
          %s152 = int_to_ptr.hbm [resolvable:$true] %s151
          %s153 = sshll.u32 [#allocation5], 4
          %s154 = int_to_ptr.vmem [resolvable:$true] %s153
          %159 = dma.hbm_to_vmem [thread:$0]  %s152, 512, %s154, [#allocation6], 128, 128, 8
        $region16: #{tpu_custom_call.1} parent=11 // pred_fallthru
          _
        // Predicated region
        $region17: #{tpu_custom_call.1} parent=11 // pred_check
          %p160 = pneg %p103
        $region18: #{tpu_custom_call.1} parent=11 // pred_check_branch
          %162 = sbr.rel (%p160) target = $region20
        $region19: #{tpu_custom_call.1} parent=11 // pred_region
          %164 = vsyncadd [#allocation6], 0
          %s165 = smul.addr %s25, 8
          %s166 = scalar_lea.hbm %s2, %s165
          %s168 = sshll.u32 %s166, 4
          %s169 = int_to_ptr.hbm [resolvable:$true] %s168
          %s170 = sshll.u32 [#allocation7], 4
          %s171 = int_to_ptr.vmem [resolvable:$true] %s170
          %173 = dma.hbm_to_vmem [thread:$0]  %s169, 128, %s171, [#allocation6]
        $region20: #{tpu_custom_call.1} parent=11 // pred_fallthru
          _
      $region12: #{tpu_custom_call.1} parent=5 // pred_fallthru
        _
      %p174 = scmp.lt.s32.totalorder %s16, 2
      // Predicated region
      $region21: #{tpu_custom_call.1} parent=5 // pred_check
        %p175 = pneg %p174
      $region22: #{tpu_custom_call.1} parent=5 // pred_check_branch
        %177 = sbr.rel (%p175) target = $region24
      $region23: #{tpu_custom_call.1} parent=5 // pred_region
        // Predicated region
        $region25: #{tpu_custom_call.1} parent=23 // pred_check
          %p178 = pneg %p50
        $region26: #{tpu_custom_call.1} parent=23 // pred_check_branch
          %180 = sbr.rel (%p178) target = $region28
        $region27: #{tpu_custom_call.1} parent=23 // pred_region
          %s181 = sand.u32 %s40, 1
          %s182 = scalar_lea.sflag [#allocation3], %s181
          %s183 = sand.u32 %s40, 1
          %s184 = smul.addr %s183, 8
          %s185 = scalar_lea.vmem [#allocation2], %s184
          %187 = vsyncadd %s182, 0
          %s188 = sadd.s32 %s23, %s24
          %s189 = smul.addr %s188, 8
          %s190 = scalar_lea.hbm %s0, %s189
          %s192 = sshll.u32 %s190, 4
          %s193 = int_to_ptr.hbm [resolvable:$true] %s192
          %s194 = sshll.u32 %s185, 4
          %s195 = int_to_ptr.vmem [resolvable:$true] %s194
          %197 = dma.hbm_to_vmem [thread:$0]  %s193, 128, %s195, %s182
        $region28: #{tpu_custom_call.1} parent=23 // pred_fallthru
          _
      $region24: #{tpu_custom_call.1} parent=5 // pred_fallthru
        _
      %p198 = scmp.le.s32.totalorder 1, %s16
      %p199 = scmp.lt.s32.totalorder %s16, 3
      %p200 = pnand %p198, %p199
      %p201 = pneg %p200
      // Predicated region
      $region29: #{tpu_custom_call.1} parent=5 // pred_check
        _
      $region30: #{tpu_custom_call.1} parent=5 // pred_check_branch
        %203 = sbr.rel (%p200) target = $region32
      $region31: #{tpu_custom_call.1} parent=5 // pred_region
        %s204 = ssub.s32 %s16, 1
        %s205 = sand.u32 %s43, 1
        %s206 = scalar_lea.sflag [#allocation3], %s205
        %s207 = sand.u32 %s43, 1
        %s208 = smul.addr %s207, 8
        %s209 = scalar_lea.vmem [#allocation2], %s208
        // Predicated region
        $region33: #{tpu_custom_call.1} parent=31 // pred_check
          %p210 = pneg %p56
        $region34: #{tpu_custom_call.1} parent=31 // pred_check_branch
          %212 = sbr.rel (%p210) target = $region36
        $region35: #{tpu_custom_call.1} parent=31 // pred_region
          %214 = dma.done %s206, 128
        $region36: #{tpu_custom_call.1} parent=31 // pred_fallthru
          _
        // Predicated region
        $region37: #{tpu_custom_call.1} parent=31 // pred_check
          %p215 = pneg %p77
        $region38: #{tpu_custom_call.1} parent=31 // pred_check_branch
          %217 = sbr.rel (%p215) target = $region40
        $region39: #{tpu_custom_call.1} parent=31 // pred_region
          %219 = dma.done [#allocation6], 512
        $region40: #{tpu_custom_call.1} parent=31 // pred_fallthru
          _
        // Predicated region
        $region41: #{tpu_custom_call.1} parent=31 // pred_check
          %p220 = pneg %p103
        $region42: #{tpu_custom_call.1} parent=31 // pred_check_branch
          %222 = sbr.rel (%p220) target = $region44
        $region43: #{tpu_custom_call.1} parent=31 // pred_region
          %224 = dma.done [#allocation6], 128
        $region44: #{tpu_custom_call.1} parent=31 // pred_fallthru
          _
        %s225 = sand.u32 %s43, 1
        %s226 = scalar_lea.sflag [#allocation3], %s225
        %s227 = sand.u32 %s43, 1
        %s228 = smul.addr %s227, 8
        %s229 = scalar_lea.vmem [#allocation2], %s228
        %p230 = pneg %p56
        %p231 = pneg %p53
        %p232 = pneg %p77
        %p233 = pneg %p74
        %p234 = pneg %p103
        %p235 = pneg %p100
        %p236 = pneg %p131
        %p237 = pneg %p128
        %s238 = sand.u32 %s118, 1
        %s239 = scalar_lea.sflag [#allocation4], %s238
        %s240 = sand.u32 %s118, 1
        %s241 = smul.addr %s240, 8
        %s242 = scalar_lea.vmem [#allocation8], %s241
        %v243 = vld [vmem:[%s209] sm:$0xff]
        %v244 = vld [vmem:[#allocation5] sm:$0xff]
        %v245 = vld [vmem:[#allocation5 + $0x8] sm:$0xff]
        %v246 = vld [vmem:[#allocation5 + $0x10] sm:$0xff]
        %v247 = vld [vmem:[#allocation5 + $0x18] sm:$0xff]
        %vm248 = vcmask 261120
        %v250 = vsel %vm248, %v243, 0
        %252 = vmatpush.msra.mxu0 0.0
        %253 = vmatpush.msra.mxu0 0.0
        %254 = vmatpush.msra.mxu0 0.0
        %255 = vmatpush.msra.mxu0 0.0
        %256 = vmatpush.msra.mxu0 0.0
        %257 = vmatpush.msra.mxu0 0.0
        %258 = vmatpush.msra.mxu0 0.0
        %259 = vmatpush.msra.mxu0 0.0
        %260 = vmatpush.msra.mxu0 0.0
        %261 = vmatpush.msra.mxu0 0.0
        %262 = vmatpush.msra.mxu0 0.0
        %263 = vmatpush.msra.mxu0 0.0
        %264 = vmatpush.msra.mxu0 %v247
        %265 = vmatpush.msra.mxu0 %v246
        %266 = vmatpush.msra.mxu0 %v245
        %267 = vmatpush.msra.mxu0 %v244
        %268 = vmatmul.f32.gmra.mxu0 %v250
        %v269 = vpop.f32.mrf.mxu0
        %v270 = vadd.f32 0.0, %v269
        %271 = vdwg.mxu0
        %v272 = vld [vmem:[#allocation7] sm:$0xff]
        %v273 = vmul.f32 %v270, %v270
        %v274 = vmul.f32 %v272, %v273
        %v275 = vsel %vm248, %v274, 0.0
        %276 = vadd.xlane.f32.xlu0 %v275
        %v277 = vpop.xlane.xlu0 %276
        %v278 = vrot.slane %v277, 4
        %v279 = vadd.f32 %v277, %v278
        %v280 = vrot.slane %v279, 2
        %v281 = vadd.f32 %v279, %v280
        %v282 = vrot.slane %v281, 1
        %v283 = vadd.f32 %v281, %v282
        %s284 = vtos %v283
        %v285 = vstv %s284
        %286 = vst [vmem:[%s242] sm:$0xff] %v285
        %s287 = sand.u32 %s118, 1
        %s288 = scalar_lea.sflag [#allocation4], %s287
        %s289 = sand.u32 %s118, 1
        %s290 = smul.addr %s289, 8
        %s291 = scalar_lea.vmem [#allocation8], %s290
        // Predicated region
        $region45: #{tpu_custom_call.1} parent=31 // pred_check
          %p292 = pneg %p128
        $region46: #{tpu_custom_call.1} parent=31 // pred_check_branch
          %294 = sbr.rel (%p292) target = $region48
        $region47: #{tpu_custom_call.1} parent=31 // pred_region
          %296 = vsyncadd %s288, 0
          %s297 = sadd.s32 %s25, %s26
          %s298 = smul.addr %s297, 8
          %s299 = scalar_lea.hbm %s3, %s298
          %s301 = sshll.u32 %s291, 4
          %s302 = int_to_ptr.vmem [resolvable:$true] %s301
          %s303 = sshll.u32 %s299, 4
          %s304 = int_to_ptr.hbm [resolvable:$true] %s303
          %306 = dma.vmem_to_hbm [thread:$0]  %s302, 128, %s304, %s288
        $region48: #{tpu_custom_call.1} parent=31 // pred_fallthru
          _
      $region32: #{tpu_custom_call.1} parent=5 // pred_fallthru
        _
      %p307 = scmp.le.s32.totalorder 2, %s16
      // Predicated region
      $region49: #{tpu_custom_call.1} parent=5 // pred_check
        %p308 = pneg %p307
      $region50: #{tpu_custom_call.1} parent=5 // pred_check_branch
        %310 = sbr.rel (%p308) target = $region52
      $region51: #{tpu_custom_call.1} parent=5 // pred_region
        %s311 = ssub.s32 %s16, 2
        // Predicated region
        $region53: #{tpu_custom_call.1} parent=51 // pred_check
          %p312 = pneg %p134
        $region54: #{tpu_custom_call.1} parent=51 // pred_check_branch
          %314 = sbr.rel (%p312) target = $region56
        $region55: #{tpu_custom_call.1} parent=51 // pred_region
          %s315 = sand.u32 %s119, 1
          %s316 = scalar_lea.sflag [#allocation4], %s315
          %s317 = sand.u32 %s119, 1
          %s318 = smul.addr %s317, 8
          %s319 = scalar_lea.vmem [#allocation8], %s318
          %321 = dma.done %s316, 128
        $region56: #{tpu_custom_call.1} parent=51 // pred_fallthru
          _
      $region52: #{tpu_custom_call.1} parent=5 // pred_fallthru
        _
    $region6: #{tpu_custom_call.1} parent=1 // loop_footer
      %s20 = sadd.s32 1, %s16
    $region7: #{tpu_custom_call.1} parent=1 // loop_footer_branch
      %15 = sbr.rel target = $region3
    $region8: #{tpu_custom_call.1} parent=1 // loop_exit
      _
    %322 = vsyncpa [#allocation3], 1
    %s323 = scalar_lea.sflag [#allocation3], 1
    %324 = vsyncpa %s323, 1
    %325 = vsyncpa [#allocation6], 1
    %326 = vsyncpa [#allocation4], 1
    %s327 = scalar_lea.sflag [#allocation4], 1
    %328 = vsyncpa %s327, 1

</llo_original>
